<compile_context>
chip_gen: v6e
topology: v6e:2x2x1
jax: 0.10.0
libtpu: 0.0.40
codegen_flags: <defaults>
</compile_context>

<pallas_src>
import functools
import math

import numpy as np
import jax
import jax.numpy as jnp
from jax.experimental import pallas as pl
from jax.experimental.pallas import tpu as pltpu


def _build_pe(max_seq_len: int, embed_dim: int) -> jnp.ndarray:
    """Reproduces the PyTorch double-loop buffer exactly (incl. its exponent quirk)."""
    pe = np.zeros((max_seq_len, embed_dim), dtype=np.float32)
    pos = np.arange(max_seq_len, dtype=np.float64)[:, None]          # (S, 1)
    i_even = np.arange(0, embed_dim, 2, dtype=np.float64)[None, :]   # (1, D/2)
    # pe[pos, i]   = sin(pos / 10000 ** (2 * i / d))
    # pe[pos, i+1] = cos(pos / 10000 ** (2 * (i + 1) / d))
    pe[:, 0::2] = np.sin(pos / np.power(10000.0, 2.0 * i_even / embed_dim))
    pe[:, 1::2] = np.cos(pos / np.power(10000.0, 2.0 * (i_even + 1.0) / embed_dim))
    return jnp.asarray(pe[None, :, :])  # (1, max_seq_len, embed_dim)


def _pos_embed_kernel(x_ref, pe_ref, o_ref, *, scale):
    # x_ref/o_ref: (Bt, 1, F); pe_ref: (1, 1, F), broadcast over the batch dim.
    # Compute stays in x's dtype (no f32 upcast) -- pure VPU work, mem-bound.
    o_ref[...] = (x_ref[...] * scale + pe_ref[...]).astype(o_ref.dtype)


def _vmem_capacity_bytes(default: int = 64 << 20) -> int:
    try:
        return int(pltpu.get_tpu_info().vmem_capacity_bytes)
    except Exception:
        return default


def _choose_tiles(B: int, L: int, itemsize: int, target_bytes: int):
    """Pick (Bt, F): batch rows per block, flattened-axis tile size (elements)."""
    row_bytes = L * itemsize
    if row_bytes >= target_bytes:
        # Tile within one flattened row; keep the tile lane-aligned (x128).
        f = (target_bytes // itemsize) // 128 * 128
        f = max(128, min(int(f), L))
        return 1, f
    # Whole row per block; fold batch rows to amortize per-step overhead
    # (and the pe load) with zero extra HBM traffic.
    bt = int(min(B, max(1, target_bytes // row_bytes)))
    return bt, int(L)


def positional_embedding(x: jnp.ndarray, pe: jnp.ndarray, *, donate_x: bool = False) -> jnp.ndarray:
    """x: (B, S, D); pe: (1, max_seq_len, D). Returns x * sqrt(D) + pe[:, :S]."""
    B, S, D = x.shape
    pe_b, max_seq_len, D_pe = pe.shape
    assert pe_b == 1 and D_pe == D and max_seq_len >= S
    scale = float(math.sqrt(D))
    itemsize = jnp.dtype(x.dtype).itemsize

    # Ship pe in x's dtype (halves pe DMA/VMEM for bf16 x; no-op for f32).
    if pe.dtype != x.dtype:
        pe = pe.astype(x.dtype)

    # Block-size target: ~4 MiB (safe on v7x's 64 MiB VMEM), ~6 MiB when a
    # 128 MiB-VMEM part (v5e/v6e) is detected.
    target_bytes = (6 << 20) if _vmem_capacity_bytes() >= (100 << 20) else (4 << 20)

    L = S * D
    Bt, F = _choose_tiles(B, L, itemsize, target_bytes)

    # Lane-dense flattened views: the last dim maps to lanes as a large multiple
    # of 128 (or the full row), regardless of D.  Contiguous reshapes are free.
    x3 = x.reshape(B, 1, L)
    if F % 128 == 0 or S == max_seq_len:
        pe3 = pe.reshape(1, 1, max_seq_len * D)      # window directly, no copy
    else:
        # Rare odd-shape fallback (L not x128 and S < max_seq_len): tiny slice
        # so the pe block's last dim equals its full array dim.
        pe3 = pe[:, :S, :].reshape(1, 1, L)

    num_f = pl.cdiv(L, F)
    num_b = pl.cdiv(B, Bt)
    grid = (num_f, num_b)   # batch innermost -> pe block reused across it

    # VMEM accounting from actual per-array block bytes (x/out/pe, each
    # double-buffered by the pipeline), plus headroom; cap safe for v7x.
    x_block_bytes = Bt * F * itemsize
    pe_block_bytes = F * itemsize
    footprint = 2 * (2 * x_block_bytes + pe_block_bytes)
    vmem_limit = int(min(48 << 20, max(4 << 20, footprint + footprint // 4 + (1 << 20))))

    kernel = functools.partial(_pos_embed_kernel, scale=scale)
    out = pl.pallas_call(
        kernel,
        out_shape=jax.ShapeDtypeStruct((B, 1, L), x.dtype),
        grid_spec=pltpu.PrefetchScalarGridSpec(
            num_scalar_prefetch=0,
            grid=grid,
            in_specs=[
                pl.BlockSpec((Bt, 1, F), lambda f, b: (b, 0, f)),   # x
                pl.BlockSpec((1, 1, F), lambda f, b: (0, 0, f)),    # pe (batch-invariant)
            ],
            out_specs=pl.BlockSpec((Bt, 1, F), lambda f, b: (b, 0, f)),
        ),
        compiler_params=pltpu.CompilerParams(
            dimension_semantics=("parallel", "parallel"),
            vmem_limit_bytes=vmem_limit,
        ),
        cost_estimate=pl.CostEstimate(
            flops=2 * B * S * D,
            bytes_accessed=2 * B * S * D * itemsize + S * D * itemsize,
            transcendentals=0,
        ),
        # Reuse x's HBM buffer for the output when the caller declares x dead.
        input_output_aliases=({0: 0} if donate_x else {}),
    )(x3, pe3)
    return out.reshape(B, S, D)


if __name__ == "__main__":
    batch, seq_len, embed_dim, max_seq_len = 2, 8, 32, 16

    key = jax.random.PRNGKey(0)
    x = jax.random.normal(key, (batch, seq_len, embed_dim), dtype=jnp.float32)

    pe = _build_pe(max_seq_len, embed_dim)

    out = positional_embedding(x, pe)
    out = jax.block_until_ready(out)

    # Reference check in plain JAX.
    ref = x * math.sqrt(embed_dim) + pe[:, :seq_len, :]
    np.testing.assert_allclose(np.asarray(out), np.asarray(ref), rtol=1e-6, atol=1e-6)

    print("KERNEL_OK")
</pallas_src>

<mosaic_0001>
module attributes {stable_mosaic.version = 11 : i64} {
  func.func @_pos_embed_kernel(%arg0: i32, %arg1: i32, %arg2: memref<2x1x256xf32, #tpu.memory_space<vmem>>, %arg3: memref<1x1x256xf32, #tpu.memory_space<vmem>>, %arg4: memref<2x1x256xf32, #tpu.memory_space<vmem>>) attributes {dimension_semantics = [#tpu.dimension_semantics<parallel>, #tpu.dimension_semantics<parallel>], iteration_bounds = array<i64: 1, 1>, scalar_prefetch = 0 : i64, scratch_operands = 0 : i64, tpu.core_type = #tpu.core_type<tc>, window_params = [{transform_indices = @transform_0, window_bounds = array<i64: 2, 1, 256>}, {transform_indices = @transform_1, window_bounds = array<i64: 1, 1, 256>}, {transform_indices = @transform_2, window_bounds = array<i64: 2, 1, 256>}]} {
    %c0 = arith.constant 0 : index
    %c0_0 = arith.constant 0 : index
    %c0_1 = arith.constant 0 : index
    %0 = vector.load %arg2[%c0, %c0_0, %c0_1] : memref<2x1x256xf32, #tpu.memory_space<vmem>>, vector<2x1x256xf32>
    %cst = arith.constant 5.65685415 : f32
    %1 = vector.broadcast %cst : f32 to vector<2x1x256xf32>
    %2 = arith.mulf %0, %1 : vector<2x1x256xf32>
    %c0_2 = arith.constant 0 : index
    %c0_3 = arith.constant 0 : index
    %c0_4 = arith.constant 0 : index
    %3 = vector.load %arg3[%c0_2, %c0_3, %c0_4] : memref<1x1x256xf32, #tpu.memory_space<vmem>>, vector<1x1x256xf32>
    %4 = vector.broadcast %3 : vector<1x1x256xf32> to vector<2x1x256xf32>
    %5 = arith.addf %2, %4 : vector<2x1x256xf32>
    %c0_5 = arith.constant 0 : index
    %c0_6 = arith.constant 0 : index
    %c0_7 = arith.constant 0 : index
    %6 = vector.load %arg4[%c0_5, %c0_6, %c0_7] : memref<2x1x256xf32, #tpu.memory_space<vmem>>, vector<2x1x256xf32>
    tpu.vector_store %arg4[%c0_5, %c0_6, %c0_7], %5 {strides = array<i32>} : memref<2x1x256xf32, #tpu.memory_space<vmem>>, vector<2x1x256xf32>,
    return
  }
  func.func @transform_0(%arg0: i32, %arg1: i32) -> (i32, i32, i32) {
    %c0_i32 = arith.constant 0 : i32
    %c0_i32_0 = arith.constant 0 : i32
    return %arg1, %c0_i32, %arg0 : i32, i32, i32
  }
  func.func @transform_1(%arg0: i32, %arg1: i32) -> (i32, i32, i32) {
    %c0_i32 = arith.constant 0 : i32
    %c0_i32_0 = arith.constant 0 : i32
    %c0_i32_1 = arith.constant 0 : i32
    return %c0_i32, %c0_i32_0, %arg0 : i32, i32, i32
  }
  func.func @transform_2(%arg0: i32, %arg1: i32) -> (i32, i32, i32) {
    %c0_i32 = arith.constant 0 : i32
    %c0_i32_0 = arith.constant 0 : i32
    return %arg1, %c0_i32, %arg0 : i32, i32, i32
  }
}

</mosaic_0001>

<llo_original>
// kernel: tpu_custom_call.1
$region0: #{tpu_custom_call.1}
  #allocation0 [shape = 'u32[]', space=smem, size = 0x4, offset = 0x4, fixed_abs, tag = 'smem constant byte address 0x4 - core index']
  #allocation1 [shape = 'u32[144,128]{1,0:T(1,128)}', space=vmem, size = 0x12000, scoped, tag = 'internal scratch']
  %s0 = inlined_call_operand.hbm [shape: f32[2,1,256], index: 0, kind: input, shape index: {}]
  %s1 = inlined_call_operand.hbm [shape: f32[1,1,512], index: 1, kind: input, shape index: {}]
  %s2 = inlined_call_operand.hbm [shape: f32[2,1,256], index: 2, kind: output, shape index: {}]
  %s3 = sld [smem:[#allocation0]]
  $region26: #{tpu_custom_call.1} parent=0
    _
  %s5 = ssub.s32 1, %s3
  %s6 = scalar_select 0, %s5, %s3
  $region1: #{tpu_custom_call.1} parent=0
    #allocation2 [shape = 'u8[2048]{0}', space=vmem, size = 0x800, scoped, tag = 'input window, operand 0, single buffered']
    #allocation3 [shape = 's32[1]{0}', space=sflag, size = 0x4, scoped, tag = 'scoped memory for tpu_custom_call.1']
    #allocation4 [shape = 's32[1]{0}', space=sflag, size = 0x4, scoped, tag = 'scoped memory for tpu_custom_call.1']
    #allocation5 [shape = 'u8[1024]{0}', space=vmem, size = 0x400, scoped, tag = 'input window, operand 1, single buffered']
    #allocation6 [shape = 's32[1]{0}', space=sflag, size = 0x4, scoped, tag = 'scoped memory for tpu_custom_call.1']
    #allocation7 [shape = 'u8[2048]{0}', space=vmem, size = 0x800, scoped, tag = 'output window, operand 0, single buffered']
    %7 = vsyncpa [#allocation3], 0
    %8 = vsyncpa [#allocation6], 0
    %9 = vsyncpa [#allocation4], 0
    // Predicated region
    $region2: #{tpu_custom_call.1} parent=1 // pred_check
      _
    $region3: #{tpu_custom_call.1} parent=1 // pred_check_branch
      %11 = sbr.rel (0) target = $region5
    $region4: #{tpu_custom_call.1} parent=1 // pred_region
      %s13 = ssub.s32 64, 64
      %14 = vsyncadd [#allocation3], %s13
      %s15 = sshll.u32 [#allocation2], 4
      %s16 = int_to_ptr.vmem [resolvable:$true] %s15
      %21 = dma.hbm_to_vmem [thread:$0]  %s0, 64, %s16, [#allocation3], 32, 32, 2
    $region5: #{tpu_custom_call.1} parent=1 // pred_fallthru
      _
    // Predicated region
    $region6: #{tpu_custom_call.1} parent=1 // pred_check
      _
    $region7: #{tpu_custom_call.1} parent=1 // pred_check_branch
      %23 = sbr.rel (0) target = $region9
    $region8: #{tpu_custom_call.1} parent=1 // pred_region
      %s25 = ssub.s32 32, 32
      %26 = vsyncadd [#allocation6], %s25
      %s28 = sshll.u32 [#allocation5], 4
      %s29 = int_to_ptr.vmem [resolvable:$true] %s28
      %31 = dma.hbm_to_vmem [thread:$0]  %s1, 32, %s29, [#allocation6]
    $region9: #{tpu_custom_call.1} parent=1 // pred_fallthru
      _
    // Predicated region
    $region10: #{tpu_custom_call.1} parent=1 // pred_check
      _
    $region11: #{tpu_custom_call.1} parent=1 // pred_check_branch
      %33 = sbr.rel (0) target = $region13
    $region12: #{tpu_custom_call.1} parent=1 // pred_region
      %34 = dma.done [#allocation3], 64
    $region13: #{tpu_custom_call.1} parent=1 // pred_fallthru
      _
    // Predicated region
    $region14: #{tpu_custom_call.1} parent=1 // pred_check
      _
    $region15: #{tpu_custom_call.1} parent=1 // pred_check_branch
      %36 = sbr.rel (0) target = $region17
    $region16: #{tpu_custom_call.1} parent=1 // pred_region
      %37 = dma.done [#allocation6], 32
    $region17: #{tpu_custom_call.1} parent=1 // pred_fallthru
      _
    %v38 = vld [vmem:[#allocation2] sm:$0x3]
    %v39 = vld [vmem:[#allocation2 + $0x2] sm:$0x3]
    %v40 = vmul.f32 %v38, 5.656854
    %v41 = vmul.f32 %v39, 5.656854
    %v42 = vld [vmem:[#allocation5] sm:$0x3]
    %v43 = vadd.f32 %v40, %v42
    %v44 = vadd.f32 %v41, %v42
    %v45 = vlaneseq
    %vm46 = vcmp.ge.s32.totalorder %v45, 0
    %vm47 = vcmp.lt.s32.totalorder %v45, 256
    %vm48 = vmand %vm46, %vm47
    %49 = vst.msk [vmem:[#allocation7] sm:$0x3] %vm48, %v43
    %50 = vst.msk [vmem:[#allocation7 + $0x2] sm:$0x3] %vm48, %v44
    // Predicated region
    $region18: #{tpu_custom_call.1} parent=1 // pred_check
      _
    $region19: #{tpu_custom_call.1} parent=1 // pred_check_branch
      %52 = sbr.rel (0) target = $region21
    $region20: #{tpu_custom_call.1} parent=1 // pred_region
      %s54 = ssub.s32 64, 64
      %55 = vsyncadd [#allocation4], %s54
      %s56 = sshll.u32 [#allocation7], 4
      %s57 = int_to_ptr.vmem [resolvable:$true] %s56
      %62 = dma.vmem_to_hbm [thread:$0]  %s57, 64, %s2, [#allocation4], 32, 32, 2
    $region21: #{tpu_custom_call.1} parent=1 // pred_fallthru
      _
    // Predicated region
    $region22: #{tpu_custom_call.1} parent=1 // pred_check
      _
    $region23: #{tpu_custom_call.1} parent=1 // pred_check_branch
      %64 = sbr.rel (0) target = $region25
    $region24: #{tpu_custom_call.1} parent=1 // pred_region
      %65 = dma.done [#allocation4], 64
    $region25: #{tpu_custom_call.1} parent=1 // pred_fallthru
      _
    %66 = vsyncpa [#allocation3], 1
    %67 = vsyncpa [#allocation6], 1
    %68 = vsyncpa [#allocation4], 1

</llo_original>
